<compile_context>
chip_gen: v7x
topology: tpu7x:2x2x1
jax: 0.10.0
libtpu: 0.0.40
codegen_flags: <defaults>
</compile_context>

<pallas_src>
import functools

import jax
import jax.numpy as jnp
from jax.experimental import pallas as pl
from jax.experimental.pallas import tpu as pltpu

_LANE = 128
_SUBLANE = 8


# ---------------------------------------------------------------------------
# Kernel
# ---------------------------------------------------------------------------
def _head_kernel(x_ref, w_ref, b_ref, o_ref, acc_ref, *, T, TT):
    # x_ref:   (TB, TT, D)  input block, streamed along the T grid axis
    # w_ref:   (D, O_pad)   packed weight, resident (constant index map)
    # b_ref:   (1, O_pad)   packed bias, resident
    # o_ref:   (TB, O_pad)  output block (lane-dense)
    # acc_ref: (TB, D) f32  pooled-sum accumulator (VMEM scratch)
    t = pl.program_id(1)
    last = pl.num_programs(1) - 1

    @pl.when(t == 0)
    def _init():
        acc_ref[...] = jnp.zeros_like(acc_ref)

    if T % TT != 0:
        # Only the final T tile is partial: steady-state tiles stay unmasked,
        # the iota/compare/select cost is paid exactly once.
        @pl.when(t < last)
        def _full_tile():
            acc_ref[...] += jnp.sum(x_ref[...].astype(jnp.float32), axis=1)

        @pl.when(t == last)
        def _tail_tile():
            x = x_ref[...].astype(jnp.float32)
            row = t * TT + jax.lax.broadcasted_iota(jnp.int32, x.shape, 1)
            x = jnp.where(row < T, x, 0.0)      # OOB rows of the last block
            acc_ref[...] += jnp.sum(x, axis=1)
    else:
        acc_ref[...] += jnp.sum(x_ref[...].astype(jnp.float32), axis=1)

    @pl.when(t == last)
    def _finalize():
        pooled = acc_ref[...] * jnp.float32(1.0 / T)               # mean over T
        y = jnp.dot(pooled, w_ref[...].astype(jnp.float32),
                    preferred_element_type=jnp.float32)            # (TB, O_pad)
        o_ref[...] = (y + b_ref[...].astype(jnp.float32)).astype(o_ref.dtype)


# ---------------------------------------------------------------------------
# Tiling / VMEM sizing helpers
# ---------------------------------------------------------------------------
def _vmem_limit_bytes():
    """Explicit scoped-VMEM limit: ~75% of physical per-core VMEM
    (~96 MiB on v5e/v6e, ~48 MiB on v7x); conservative 48 MiB if unknown."""
    try:
        info = pltpu.get_tpu_info()
        cap = getattr(info, "vmem_capacity_bytes", None)
        if cap:
            return int(cap) * 3 // 4
    except Exception:
        pass
    return 48 * 1024 * 1024


def _pad_up(n, m):
    return ((n + m - 1) // m) * m


def _choose_batch_tile(B_pad, cap=128):
    """Largest multiple-of-8 divisor of B_pad that still leaves >= 2 batch
    tiles, so the 'parallel' batch axis can split across v7x's 2 TensorCores."""
    if B_pad <= _SUBLANE:
        return B_pad
    best = _SUBLANE
    tb = _SUBLANE
    limit = min(B_pad // 2, cap)
    while tb <= limit:
        if B_pad % tb == 0:
            best = tb
        tb += _SUBLANE
    return best


def _choose_t_tile(TB, T, D, itemsize, per_buffer_budget):
    """Largest multiple-of-8 T tile whose (TB, TT, D) block fits the per-buffer
    byte budget (block bytes, not row count, drive TT)."""
    if T <= _SUBLANE:
        return T
    per_row = TB * D * itemsize
    tt = max(_SUBLANE, int(per_buffer_budget // per_row))
    if tt >= T:
        return T
    return max(_SUBLANE, (tt // _SUBLANE) * _SUBLANE)


# ---------------------------------------------------------------------------
# Parameter packing (hoisted out of the per-call path)
# ---------------------------------------------------------------------------
def pack_head_params(weight, bias):
    """Pack nn.Linear params (O, D) / (O,) into the lane-dense layout the
    kernel wants: (D, O_pad) and (1, O_pad), O_pad a multiple of 128.
    Call this ONCE per model; reuse the result across segments."""
    O, D = weight.shape
    O_pad = max(_LANE, _pad_up(O, _LANE))
    w_packed = jnp.zeros((D, O_pad), dtype=weight.dtype).at[:, :O].set(weight.T)
    b_packed = jnp.zeros((1, O_pad), dtype=bias.dtype).at[0, :O].set(bias)
    return w_packed, b_packed, O


# ---------------------------------------------------------------------------
# Pallas call wrapper
# ---------------------------------------------------------------------------
def segment_level_classification_head_packed(x, w_packed, b_packed, num_out):
    """
    x:        (B, T, D)
    w_packed: (D, O_pad)   from pack_head_params
    b_packed: (1, O_pad)
    returns   (B, num_out) float32
    """
    B, T, D = x.shape
    O_pad = w_packed.shape[1]
    x_itemsize = jnp.dtype(x.dtype).itemsize

    # Batch padding: keeps batch blocks a multiple of 8 (sublane rule) and
    # keeps the batch grid axis splittable instead of one giant block.
    if B > _SUBLANE and B % _SUBLANE != 0:
        B_pad = _pad_up(B, _SUBLANE)
        x = jnp.pad(x, ((0, B_pad - B), (0, 0), (0, 0)))
    else:
        B_pad = B
    TB = _choose_batch_tile(B_pad)

    # Explicit VMEM accounting: limit, resident blocks, then x-buffer budget.
    vmem_limit = _vmem_limit_bytes()
    w_bytes = w_packed.size * jnp.dtype(w_packed.dtype).itemsize
    b_bytes = b_packed.size * jnp.dtype(b_packed.dtype).itemsize
    out_bytes = 2 * TB * O_pad * 4          # double-buffered f32 output block
    acc_bytes = TB * D * 4                  # f32 accumulator scratch
    internal = 1 << 20                      # compiler-internal scratch slack
    # Worst case: constants double-buffered (if Buffered(1) is unsupported).
    resident = 2 * (w_bytes + b_bytes) + out_bytes + acc_bytes + internal
    per_buffer = (vmem_limit - resident) // 2       # x uses 2 pipeline buffers
    per_buffer = max(512 * 1024, min(per_buffer, 16 * 1024 * 1024))
    TT = _choose_t_tile(TB, T, D, x_itemsize, per_buffer)

    grid = (B_pad // TB, pl.cdiv(T, TT))    # reduction (T) axis last

    def build(single_buffer_consts):
        const_kw = {}
        if single_buffer_consts:
            # Constant index map -> one resident copy is enough.
            const_kw["pipeline_mode"] = pl.Buffered(1)
        return pl.pallas_call(
            functools.partial(_head_kernel, T=T, TT=TT),
            out_shape=jax.ShapeDtypeStruct((B_pad, O_pad), jnp.float32),
            grid_spec=pltpu.PrefetchScalarGridSpec(
                num_scalar_prefetch=0,
                grid=grid,
                in_specs=[
                    # x streamed in (TB, TT, D) blocks, double-buffered.
                    pl.BlockSpec((TB, TT, D), lambda b, t: (b, t, 0)),
                    # weight / bias: fetched once, resident.
                    pl.BlockSpec((D, O_pad), lambda b, t: (0, 0), **const_kw),
                    pl.BlockSpec((1, O_pad), lambda b, t: (0, 0), **const_kw),
                ],
                out_specs=pl.BlockSpec((TB, O_pad), lambda b, t: (b, 0)),
                scratch_shapes=[pltpu.VMEM((TB, D), jnp.float32)],
            ),
            compiler_params=pltpu.CompilerParams(
                dimension_semantics=("parallel", "arbitrary"),
                vmem_limit_bytes=vmem_limit),
        )

    try:
        out = build(True)(x, w_packed, b_packed)
    except Exception:
        # This jax build rejects pipeline_mode=pl.Buffered(1); the VMEM budget
        # already assumed double-buffered constants, so fall back safely.
        out = build(False)(x, w_packed, b_packed)

    return out[:B, :num_out]


def segment_level_classification_head(x, weight, bias):
    """Convenience wrapper (packs params per call). For repeated inference,
    call pack_head_params() once and use the *_packed variant."""
    w_packed, b_packed, O = pack_head_params(weight, bias)
    return segment_level_classification_head_packed(x, w_packed, b_packed, O)


def reference(x, weight, bias):
    return jnp.mean(x, axis=1) @ weight.T + bias


if __name__ == "__main__":
    # Small shapes consistent with the module's forward:
    #   model_dim=32, num_classes=5, num_streams=3, batch=2, seq=8
    B, T, D = 2, 8, 32
    num_classes, num_streams = 5, 3
    O = num_classes * num_streams

    key = jax.random.PRNGKey(0)
    kx, kw, kb = jax.random.split(key, 3)

    x = jax.random.normal(kx, (B, T, D), dtype=jnp.float32)
    bound = 1.0 / jnp.sqrt(D)
    weight = jax.random.uniform(kw, (O, D), minval=-bound, maxval=bound,
                                dtype=jnp.float32)
    bias = jax.random.uniform(kb, (O,), minval=-bound, maxval=bound,
                              dtype=jnp.float32)

    # Pack parameters once (hoisted out of the per-segment call path).
    w_packed, b_packed, num_out = pack_head_params(weight, bias)
    out = segment_level_classification_head_packed(x, w_packed, b_packed, num_out)
    out = jax.block_until_ready(out)

    ref = reference(x, weight, bias)
    assert out.shape == (B, O)
    assert jnp.allclose(out, ref, atol=1e-5, rtol=1e-5), (
        f"max abs err {jnp.max(jnp.abs(out - ref))}")

    print("KERNEL_OK")
</pallas_src>

<mosaic_0001>
module attributes {stable_mosaic.version = 11 : i64} {
  func.func @_head_kernel(%arg0: i32, %arg1: i32, %arg2: memref<2x8x32xf32, #tpu.memory_space<vmem>>, %arg3: memref<32x128xf32, #tpu.memory_space<vmem>>, %arg4: memref<1x128xf32, #tpu.memory_space<vmem>>, %arg5: memref<2x128xf32, #tpu.memory_space<vmem>>, %arg6: memref<2x32xf32, #tpu.memory_space<vmem>>) attributes {dimension_semantics = [#tpu.dimension_semantics<parallel>, #tpu.dimension_semantics<arbitrary>], iteration_bounds = array<i64: 1, 1>, scalar_prefetch = 0 : i64, scratch_operands = 1 : i64, tpu.core_type = #tpu.core_type<tc>, window_params = [{transform_indices = @transform_0, window_bounds = array<i64: 2, 8, 32>}, {pipeline_mode = #tpu.pipeline_mode<synchronous>, transform_indices = @transform_1, window_bounds = array<i64: 32, 128>}, {pipeline_mode = #tpu.pipeline_mode<synchronous>, transform_indices = @transform_2, window_bounds = array<i64: 1, 128>}, {transform_indices = @transform_3, window_bounds = array<i64: 2, 128>}]} {
    %c0_i32 = arith.constant 0 : i32
    %0 = arith.cmpi eq, %arg1, %c0_i32 : i32
    %1 = arith.extui %0 : i1 to i32
    %c0_i32_0 = arith.constant 0 : i32
    %2 = arith.cmpi ne, %1, %c0_i32_0 : i32
    scf.if %2 {
      %cst_9 = arith.constant 0.000000e+00 : f32
      %11 = vector.broadcast %cst_9 : f32 to vector<2x32xf32>
      %c0_10 = arith.constant 0 : index
      %c0_11 = arith.constant 0 : index
      %12 = vector.load %arg6[%c0_10, %c0_11] : memref<2x32xf32, #tpu.memory_space<vmem>>, vector<2x32xf32>
      tpu.vector_store %arg6[%c0_10, %c0_11], %11 {strides = array<i32>} : memref<2x32xf32, #tpu.memory_space<vmem>>, vector<2x32xf32>,
    } else {
    }
    %c0 = arith.constant 0 : index
    %c0_1 = arith.constant 0 : index
    %3 = vector.load %arg6[%c0, %c0_1] : memref<2x32xf32, #tpu.memory_space<vmem>>, vector<2x32xf32>
    %c0_2 = arith.constant 0 : index
    %c0_3 = arith.constant 0 : index
    %c0_4 = arith.constant 0 : index
    %4 = vector.load %arg2[%c0_2, %c0_3, %c0_4] : memref<2x8x32xf32, #tpu.memory_space<vmem>>, vector<2x8x32xf32>
    %cst = arith.constant dense<0.000000e+00> : vector<2x32xf32>
    %5 = vector.multi_reduction <add>, %4, %cst [1] : vector<2x8x32xf32> to vector<2x32xf32>
    %6 = arith.addf %3, %5 : vector<2x32xf32>
    %c0_5 = arith.constant 0 : index
    %c0_6 = arith.constant 0 : index
    %7 = vector.load %arg6[%c0_5, %c0_6] : memref<2x32xf32, #tpu.memory_space<vmem>>, vector<2x32xf32>
    tpu.vector_store %arg6[%c0_5, %c0_6], %6 {strides = array<i32>} : memref<2x32xf32, #tpu.memory_space<vmem>>, vector<2x32xf32>,
    %c0_i32_7 = arith.constant 0 : i32
    %8 = arith.cmpi eq, %arg1, %c0_i32_7 : i32
    %9 = arith.extui %8 : i1 to i32
    %c0_i32_8 = arith.constant 0 : i32
    %10 = arith.cmpi ne, %9, %c0_i32_8 : i32
    scf.if %10 {
      %c0_9 = arith.constant 0 : index
      %c0_10 = arith.constant 0 : index
      %11 = vector.load %arg6[%c0_9, %c0_10] : memref<2x32xf32, #tpu.memory_space<vmem>>, vector<2x32xf32>
      %cst_11 = arith.constant 1.250000e-01 : f32
      %12 = vector.broadcast %cst_11 : f32 to vector<2x32xf32>
      %13 = arith.mulf %11, %12 : vector<2x32xf32>
      %c0_12 = arith.constant 0 : index
      %c0_13 = arith.constant 0 : index
      %14 = vector.load %arg3[%c0_12, %c0_13] : memref<32x128xf32, #tpu.memory_space<vmem>>, vector<32x128xf32>
      %cst_14 = arith.constant dense<0.000000e+00> : vector<2x128xf32>
      %15 = tpu.matmul %13, %14, %cst_14 {dimension_numbers = #tpu.dot_dimension_numbers<[1], [0], [0], [1], [0, 0, 1, 1], [], []>} : vector<2x32xf32>, vector<32x128xf32>, vector<2x128xf32> -> vector<2x128xf32>
      %c0_15 = arith.constant 0 : index
      %c0_16 = arith.constant 0 : index
      %16 = vector.load %arg4[%c0_15, %c0_16] : memref<1x128xf32, #tpu.memory_space<vmem>>, vector<1x128xf32>
      %17 = vector.broadcast %16 : vector<1x128xf32> to vector<2x128xf32>
      %18 = arith.addf %15, %17 : vector<2x128xf32>
      %c0_17 = arith.constant 0 : index
      %c0_18 = arith.constant 0 : index
      %19 = vector.load %arg5[%c0_17, %c0_18] : memref<2x128xf32, #tpu.memory_space<vmem>>, vector<2x128xf32>
      tpu.vector_store %arg5[%c0_17, %c0_18], %18 {strides = array<i32>} : memref<2x128xf32, #tpu.memory_space<vmem>>, vector<2x128xf32>,
    } else {
    }
    return
  }
  func.func @transform_0(%arg0: i32, %arg1: i32) -> (i32, i32, i32) {
    %c0_i32 = arith.constant 0 : i32
    %c0_i32_0 = arith.constant 0 : i32
    return %arg0, %arg1, %c0_i32 : i32, i32, i32
  }
  func.func @transform_1(%arg0: i32, %arg1: i32) -> (i32, i32) {
    %c0_i32 = arith.constant 0 : i32
    %c0_i32_0 = arith.constant 0 : i32
    %c0_i32_1 = arith.constant 0 : i32
    return %c0_i32, %c0_i32_0 : i32, i32
  }
  func.func @transform_2(%arg0: i32, %arg1: i32) -> (i32, i32) {
    %c0_i32 = arith.constant 0 : i32
    %c0_i32_0 = arith.constant 0 : i32
    %c0_i32_1 = arith.constant 0 : i32
    return %c0_i32, %c0_i32_0 : i32, i32
  }
  func.func @transform_3(%arg0: i32, %arg1: i32) -> (i32, i32) {
    %c0_i32 = arith.constant 0 : i32
    %c0_i32_0 = arith.constant 0 : i32
    return %arg0, %c0_i32 : i32, i32
  }
}

module attributes {stable_mosaic.version = 11 : i64} {
  func.func @_head_kernel(%arg0: i32, %arg1: i32, %arg2: memref<2x8x32xf32, #tpu.memory_space<vmem>>, %arg3: memref<32x128xf32, #tpu.memory_space<vmem>>, %arg4: memref<1x128xf32, #tpu.memory_space<vmem>>, %arg5: memref<2x128xf32, #tpu.memory_space<vmem>>, %arg6: memref<2x32xf32, #tpu.memory_space<vmem>>) attributes {dimension_semantics = [#tpu.dimension_semantics<parallel>, #tpu.dimension_semantics<arbitrary>], iteration_bounds = array<i64: 1, 1>, scalar_prefetch = 0 : i64, scratch_operands = 1 : i64, tpu.core_type = #tpu.core_type<tc>, window_params = [{transform_indices = @transform_0, window_bounds = array<i64: 2, 8, 32>}, {pipeline_mode = #tpu.pipeline_mode<synchronous>, transform_indices = @transform_1, window_bounds = array<i64: 32, 128>}, {pipeline_mode = #tpu.pipeline_mode<synchronous>, transform_indices = @transform_2, window_bounds = array<i64: 1, 128>}, {transform_indices = @transform_3, window_bounds = array<i64: 2, 128>}]} {
    %c0_i32 = arith.constant 0 : i32
    %0 = arith.cmpi eq, %arg1, %c0_i32 : i32
    %1 = arith.extui %0 : i1 to i32
    %c0_i32_0 = arith.constant 0 : i32
    %2 = arith.cmpi ne, %1, %c0_i32_0 : i32
    scf.if %2 {
      %cst_9 = arith.constant 0.000000e+00 : f32
      %11 = vector.broadcast %cst_9 : f32 to vector<2x32xf32>
      %c0_10 = arith.constant 0 : index
      %c0_11 = arith.constant 0 : index
      %12 = vector.load %arg6[%c0_10, %c0_11] : memref<2x32xf32, #tpu.memory_space<vmem>>, vector<2x32xf32>
      tpu.vector_store %arg6[%c0_10, %c0_11], %11 {strides = array<i32>} : memref<2x32xf32, #tpu.memory_space<vmem>>, vector<2x32xf32>,
    } else {
    }
    %c0 = arith.constant 0 : index
    %c0_1 = arith.constant 0 : index
    %3 = vector.load %arg6[%c0, %c0_1] : memref<2x32xf32, #tpu.memory_space<vmem>>, vector<2x32xf32>
    %c0_2 = arith.constant 0 : index
    %c0_3 = arith.constant 0 : index
    %c0_4 = arith.constant 0 : index
    %4 = vector.load %arg2[%c0_2, %c0_3, %c0_4] : memref<2x8x32xf32, #tpu.memory_space<vmem>>, vector<2x8x32xf32>
    %cst = arith.constant dense<0.000000e+00> : vector<2x32xf32>
    %5 = vector.multi_reduction <add>, %4, %cst [1] : vector<2x8x32xf32> to vector<2x32xf32>
    %6 = arith.addf %3, %5 : vector<2x32xf32>
    %c0_5 = arith.constant 0 : index
    %c0_6 = arith.constant 0 : index
    %7 = vector.load %arg6[%c0_5, %c0_6] : memref<2x32xf32, #tpu.memory_space<vmem>>, vector<2x32xf32>
    tpu.vector_store %arg6[%c0_5, %c0_6], %6 {strides = array<i32>} : memref<2x32xf32, #tpu.memory_space<vmem>>, vector<2x32xf32>,
    %c0_i32_7 = arith.constant 0 : i32
    %8 = arith.cmpi eq, %arg1, %c0_i32_7 : i32
    %9 = arith.extui %8 : i1 to i32
    %c0_i32_8 = arith.constant 0 : i32
    %10 = arith.cmpi ne, %9, %c0_i32_8 : i32
    scf.if %10 {
      %c0_9 = arith.constant 0 : index
      %c0_10 = arith.constant 0 : index
      %11 = vector.load %arg6[%c0_9, %c0_10] : memref<2x32xf32, #tpu.memory_space<vmem>>, vector<2x32xf32>
      %cst_11 = arith.constant 1.250000e-01 : f32
      %12 = vector.broadcast %cst_11 : f32 to vector<2x32xf32>
      %13 = arith.mulf %11, %12 : vector<2x32xf32>
      %c0_12 = arith.constant 0 : index
      %c0_13 = arith.constant 0 : index
      %14 = vector.load %arg3[%c0_12, %c0_13] : memref<32x128xf32, #tpu.memory_space<vmem>>, vector<32x128xf32>
      %cst_14 = arith.constant dense<0.000000e+00> : vector<2x128xf32>
      %15 = tpu.matmul %13, %14, %cst_14 {dimension_numbers = #tpu.dot_dimension_numbers<[1], [0], [0], [1], [0, 0, 1, 1], [], []>} : vector<2x32xf32>, vector<32x128xf32>, vector<2x128xf32> -> vector<2x128xf32>
      %c0_15 = arith.constant 0 : index
      %c0_16 = arith.constant 0 : index
      %16 = vector.load %arg4[%c0_15, %c0_16] : memref<1x128xf32, #tpu.memory_space<vmem>>, vector<1x128xf32>
      %17 = vector.broadcast %16 : vector<1x128xf32> to vector<2x128xf32>
      %18 = arith.addf %15, %17 : vector<2x128xf32>
      %c0_17 = arith.constant 0 : index
      %c0_18 = arith.constant 0 : index
      %19 = vector.load %arg5[%c0_17, %c0_18] : memref<2x128xf32, #tpu.memory_space<vmem>>, vector<2x128xf32>
      tpu.vector_store %arg5[%c0_17, %c0_18], %18 {strides = array<i32>} : memref<2x128xf32, #tpu.memory_space<vmem>>, vector<2x128xf32>,
    } else {
    }
    return
  }
  func.func @transform_0(%arg0: i32, %arg1: i32) -> (i32, i32, i32) {
    %c0_i32 = arith.constant 0 : i32
    %c0_i32_0 = arith.constant 0 : i32
    return %arg0, %arg1, %c0_i32 : i32, i32, i32
  }
  func.func @transform_1(%arg0: i32, %arg1: i32) -> (i32, i32) {
    %c0_i32 = arith.constant 0 : i32
    %c0_i32_0 = arith.constant 0 : i32
    %c0_i32_1 = arith.constant 0 : i32
    return %c0_i32, %c0_i32_0 : i32, i32
  }
  func.func @transform_2(%arg0: i32, %arg1: i32) -> (i32, i32) {
    %c0_i32 = arith.constant 0 : i32
    %c0_i32_0 = arith.constant 0 : i32
    %c0_i32_1 = arith.constant 0 : i32
    return %c0_i32, %c0_i32_0 : i32, i32
  }
  func.func @transform_3(%arg0: i32, %arg1: i32) -> (i32, i32) {
    %c0_i32 = arith.constant 0 : i32
    %c0_i32_0 = arith.constant 0 : i32
    return %arg0, %c0_i32 : i32, i32
  }
}

</mosaic_0001>

<llo_original>
// kernel: tpu_custom_call.1
$region0: #{tpu_custom_call.1}
  #allocation0 [shape = 'u32[]', space=smem, size = 0x4, offset = 0x4, fixed_abs, tag = 'smem constant byte address 0x4 - core index']
  #allocation1 [shape = 'u32[144,128]{1,0:T(1,128)}', space=vmem, size = 0x12000, scoped, tag = 'internal scratch']
  #allocation2 [shape = 'f32[2,32]{1,0:T(2,128)}', space=vmem, size = 0x400, scoped, tag = 'scratch operand']
  %s0 = inlined_call_operand.hbm [shape: f32[2,8,32], index: 0, kind: input, shape index: {}]
  %s1 = inlined_call_operand.hbm [shape: f32[32,128], index: 1, kind: input, shape index: {}]
  %s2 = inlined_call_operand.vmem [shape: f32[1,128], index: 2, kind: input, shape index: {}]
  %s3 = inlined_call_operand.hbm [shape: f32[2,128], index: 3, kind: output, shape index: {}]
  %s4 = sld [smem:[#allocation0]]
  $region38: #{tpu_custom_call.1} parent=0
    _
  %s6 = ssub.s32 1, %s4
  %s7 = scalar_select 0, %s6, %s4
  $region1: #{tpu_custom_call.1} parent=0
    #allocation3 [shape = 'u8[8192]{0}', space=vmem, size = 0x2000, scoped, tag = 'input window, operand 0, single buffered']
    #allocation4 [shape = 's32[1]{0}', space=sflag, size = 0x4, scoped, tag = 'scoped memory for tpu_custom_call.1']
    #allocation5 [shape = 's32[1]{0}', space=sflag, size = 0x4, scoped, tag = 'scoped memory for tpu_custom_call.1']
    #allocation6 [shape = 'u8[16384]{0}', space=vmem, size = 0x4000, scoped, tag = 'input window, operand 1, single buffered']
    #allocation7 [shape = 's32[1]{0}', space=sflag, size = 0x4, scoped, tag = 'scoped memory for tpu_custom_call.1']
    #allocation8 [shape = 'u8[1024]{0}', space=vmem, size = 0x400, scoped, tag = 'output window, operand 0, single buffered']
    %8 = vsyncpa [#allocation4], 0
    %9 = vsyncpa [#allocation7], 0
    %10 = vsyncpa [#allocation5], 0
    // Predicated region
    $region2: #{tpu_custom_call.1} parent=1 // pred_check
      _
    $region3: #{tpu_custom_call.1} parent=1 // pred_check_branch
      %12 = sbr.rel (0) target = $region5
    $region4: #{tpu_custom_call.1} parent=1 // pred_region
      %s14 = ssub.s32 256, 256
      %15 = vsyncadd [#allocation4], %s14
      %s16 = sshll.u32 [#allocation3], 4
      %s17 = int_to_ptr.vmem [resolvable:$true] %s16
      %22 = dma.hbm_to_vmem [thread:$0]  %s0, 256, %s17, [#allocation4], 128, 128, 8
    $region5: #{tpu_custom_call.1} parent=1 // pred_fallthru
      _
    // Predicated region
    $region6: #{tpu_custom_call.1} parent=1 // pred_check
      _
    $region7: #{tpu_custom_call.1} parent=1 // pred_check_branch
      %24 = sbr.rel (0) target = $region9
    $region8: #{tpu_custom_call.1} parent=1 // pred_region
      %s26 = ssub.s32 512, 512
      %27 = vsyncadd [#allocation7], %s26
      %s28 = sshll.u32 [#allocation6], 4
      %s29 = int_to_ptr.vmem [resolvable:$true] %s28
      %34 = dma.hbm_to_vmem [thread:$0]  %s1, 512, %s29, [#allocation7], 128, 128, 8
    $region9: #{tpu_custom_call.1} parent=1 // pred_fallthru
      _
    // Predicated region
    $region10: #{tpu_custom_call.1} parent=1 // pred_check
      _
    $region11: #{tpu_custom_call.1} parent=1 // pred_check_branch
      %36 = sbr.rel (0) target = $region13
    $region12: #{tpu_custom_call.1} parent=1 // pred_region
      _
    $region13: #{tpu_custom_call.1} parent=1 // pred_fallthru
      _
    // Predicated region
    $region14: #{tpu_custom_call.1} parent=1 // pred_check
      _
    $region15: #{tpu_custom_call.1} parent=1 // pred_check_branch
      %38 = sbr.rel (0) target = $region17
    $region16: #{tpu_custom_call.1} parent=1 // pred_region
      %39 = dma.done [#allocation4], 256
    $region17: #{tpu_custom_call.1} parent=1 // pred_fallthru
      _
    // Predicated region
    $region18: #{tpu_custom_call.1} parent=1 // pred_check
      _
    $region19: #{tpu_custom_call.1} parent=1 // pred_check_branch
      %41 = sbr.rel (0) target = $region21
    $region20: #{tpu_custom_call.1} parent=1 // pred_region
      %42 = dma.done [#allocation7], 512
    $region21: #{tpu_custom_call.1} parent=1 // pred_fallthru
      _
    %p43 = scmp.eq.s32.totalorder 0, 0
    // Predicated region
    $region22: #{tpu_custom_call.1} parent=1 // pred_check
      %p44 = pneg %p43
    $region23: #{tpu_custom_call.1} parent=1 // pred_check_branch
      %46 = sbr.rel (%p44) target = $region25
    $region24: #{tpu_custom_call.1} parent=1 // pred_region
      %vm47 = vcmask 254976
      %48 = vst.msk [vmem:[#allocation2] sm:$0x3] %vm47, 0.0
    $region25: #{tpu_custom_call.1} parent=1 // pred_fallthru
      _
    %v49 = vld [vmem:[#allocation2] sm:$0x3]
    %v50 = vld [vmem:[#allocation3] sm:$0xff]
    %v51 = vld [vmem:[#allocation3 + $0x8] sm:$0xff]
    %vm52 = vcmask 261120
    %v53 = vsel %vm52, %v50, 0.0
    %v54 = vrot.slane %v53, 4
    %v55 = vadd.f32 %v53, %v54
    %v56 = vrot.slane %v55, 2
    %v57 = vadd.f32 %v55, %v56
    %v58 = vrot.slane %v57, 1
    %v59 = vadd.f32 %v57, %v58
    %v60 = vsel %vm52, %v51, 0.0
    %v61 = vrot.slane %v60, 4
    %v62 = vadd.f32 %v60, %v61
    %v63 = vrot.slane %v62, 2
    %v64 = vadd.f32 %v62, %v63
    %v65 = vrot.slane %v64, 1
    %v66 = vadd.f32 %v64, %v65
    %vm69 = vcmask 1041409
    %v70 = vsel %vm69, %v66, %v59
    %v72 = vadd.f32 %v49, %v70
    %vm73 = vcmask 254976
    %74 = vst.msk [vmem:[#allocation2] sm:$0x3] %vm73, %v72
    // Predicated region
    $region26: #{tpu_custom_call.1} parent=1 // pred_check
      %p75 = pneg %p43
    $region27: #{tpu_custom_call.1} parent=1 // pred_check_branch
      %77 = sbr.rel (%p75) target = $region29
    $region28: #{tpu_custom_call.1} parent=1 // pred_region
      %v78 = vld [vmem:[#allocation2] sm:$0x3]
      %v79 = vmul.f32 %v78, 0.125
      %v80 = vld [vmem:[#allocation6] sm:$0xff]
      %v81 = vld [vmem:[#allocation6 + $0x8] sm:$0xff]
      %v82 = vld [vmem:[#allocation6 + $0x10] sm:$0xff]
      %v83 = vld [vmem:[#allocation6 + $0x18] sm:$0xff]
      %v84 = vld [vmem:[%s2] sm:$0x1]
      %v86 = vlaneseq
      %v87 = vshrl.u32 %v86, 7
      %v88 = vsub.s32 0, %v87
      %v89 = vrot.slane %v84, %v88
      %v92 = vsel %vm52, %v79, 0
      %94 = vmatprep.subr.mxu0 0.0
      %95 = vmatpush1.msra.mxu0 %v80
      %96 = vmatprep.subr.mxu0 0.0
      %97 = vmatpush1.msra.mxu0 %v81
      %98 = vmatprep.subr.mxu0 0.0
      %99 = vmatpush1.msra.mxu0 %v82
      %100 = vmatprep.subr.mxu0 0.0
      %101 = vmatpush1.msra.mxu0 %v83
      %102 = vmatprep.subr.mxu0 0.0
      %103 = vmatpush1.msra.mxu0 0.0
      %104 = vmatprep.subr.mxu0 0.0
      %105 = vmatpush1.msra.mxu0 0.0
      %106 = vmatprep.subr.mxu0 0.0
      %107 = vmatpush1.msra.mxu0 0.0
      %108 = vmatprep.subr.mxu0 0.0
      %109 = vmatpush1.msra.mxu0 0.0
      %110 = vmatprep.subr.mxu0 0.0
      %111 = vmatpush1.msra.mxu0 0.0
      %112 = vmatprep.subr.mxu0 0.0
      %113 = vmatpush1.msra.mxu0 0.0
      %114 = vmatprep.subr.mxu0 0.0
      %115 = vmatpush1.msra.mxu0 0.0
      %116 = vmatprep.subr.mxu0 0.0
      %117 = vmatpush1.msra.mxu0 0.0
      %118 = vmatprep.subr.mxu0 0.0
      %119 = vmatpush1.msra.mxu0 0.0
      %120 = vmatprep.subr.mxu0 0.0
      %121 = vmatpush1.msra.mxu0 0.0
      %122 = vmatprep.subr.mxu0 0.0
      %123 = vmatpush1.msra.mxu0 0.0
      %124 = vmatprep.subr.mxu0 0.0
      %125 = vmatpush1.msra.mxu0 0.0
      %126 = vmatprep.subr.mxu0 0.0
      %127 = vmatpush1.msra.mxu0 0.0
      %128 = vmatprep.subr.mxu0 0.0
      %129 = vmatpush1.msra.mxu0 0.0
      %130 = vmatprep.subr.mxu0 0.0
      %131 = vmatpush1.msra.mxu0 0.0
      %132 = vmatprep.subr.mxu0 0.0
      %133 = vmatpush1.msra.mxu0 0.0
      %134 = vmatprep.subr.mxu0 0.0
      %135 = vmatpush1.msra.mxu0 0.0
      %136 = vmatprep.subr.mxu0 0.0
      %137 = vmatpush1.msra.mxu0 0.0
      %138 = vmatprep.subr.mxu0 0.0
      %139 = vmatpush1.msra.mxu0 0.0
      %140 = vmatprep.subr.mxu0 0.0
      %141 = vmatpush1.msra.mxu0 0.0
      %142 = vmatprep.subr.mxu0 0.0
      %143 = vmatpush1.msra.mxu0 0.0
      %144 = vmatprep.subr.mxu0 0.0
      %145 = vmatpush1.msra.mxu0 0.0
      %146 = vmatprep.subr.mxu0 0.0
      %147 = vmatpush1.msra.mxu0 0.0
      %148 = vmatprep.subr.mxu0 0.0
      %149 = vmatpush1.msra.mxu0 0.0
      %150 = vmatprep.subr.mxu0 0.0
      %151 = vmatpush1.msra.mxu0 0.0
      %152 = vmatprep.subr.mxu0 0.0
      %153 = vmatpush1.msra.mxu0 0.0
      %154 = vmatprep.subr.mxu0 0.0
      %155 = vmatpush1.msra.mxu0 0.0
      %156 = vmatprep.subr.mxu0 0.0
      %157 = vmatpush1.msra.mxu0 0.0
      %158 = vmatprep.mubr.f32.mxu0 0.0
      %159 = vmatmul.mubr.f32.gmra.mrb[0].mxu0 %v92
      %v160 = vpop.f32.mrb[0].mxu0
      %v161 = vadd.f32 %v89, %v160
      %v162 = vpop.f32.mrb[0].mxu0
      %163 = vdwg.mxu0
      %164 = vst [vmem:[#allocation8] sm:$0x3] %v161
    $region29: #{tpu_custom_call.1} parent=1 // pred_fallthru
      _
    // Predicated region
    $region30: #{tpu_custom_call.1} parent=1 // pred_check
      _
    $region31: #{tpu_custom_call.1} parent=1 // pred_check_branch
      %166 = sbr.rel (0) target = $region33
    $region32: #{tpu_custom_call.1} parent=1 // pred_region
      %s168 = ssub.s32 32, 32
      %169 = vsyncadd [#allocation5], %s168
      %s171 = sshll.u32 [#allocation8], 4
      %s172 = int_to_ptr.vmem [resolvable:$true] %s171
      %174 = dma.vmem_to_hbm [thread:$0]  %s172, 32, %s3, [#allocation5]
    $region33: #{tpu_custom_call.1} parent=1 // pred_fallthru
      _
    // Predicated region
    $region34: #{tpu_custom_call.1} parent=1 // pred_check
      _
    $region35: #{tpu_custom_call.1} parent=1 // pred_check_branch
      %176 = sbr.rel (0) target = $region37
    $region36: #{tpu_custom_call.1} parent=1 // pred_region
      %177 = dma.done [#allocation5], 32
    $region37: #{tpu_custom_call.1} parent=1 // pred_fallthru
      _
    %178 = vsyncpa [#allocation4], 1
    %179 = vsyncpa [#allocation7], 1
    %180 = vsyncpa [#allocation5], 1

// kernel: tpu_custom_call.1
$region0: #{tpu_custom_call.1}
  #allocation0 [shape = 'u32[]', space=smem, size = 0x4, offset = 0x4, fixed_abs, tag = 'smem constant byte address 0x4 - core index']
  #allocation1 [shape = 'u32[144,128]{1,0:T(1,128)}', space=vmem, size = 0x12000, scoped, tag = 'internal scratch']
  #allocation2 [shape = 'f32[2,32]{1,0:T(2,128)}', space=vmem, size = 0x400, scoped, tag = 'scratch operand']
  %s0 = inlined_call_operand.hbm [shape: f32[2,8,32], index: 0, kind: input, shape index: {}]
  %s1 = inlined_call_operand.hbm [shape: f32[32,128], index: 1, kind: input, shape index: {}]
  %s2 = inlined_call_operand.vmem [shape: f32[1,128], index: 2, kind: input, shape index: {}]
  %s3 = inlined_call_operand.hbm [shape: f32[2,128], index: 3, kind: output, shape index: {}]
  %s4 = sld [smem:[#allocation0]]
  $region38: #{tpu_custom_call.1} parent=0
    _
  %s6 = ssub.s32 1, %s4
  %s7 = scalar_select 0, %s6, %s4
  $region1: #{tpu_custom_call.1} parent=0
    #allocation3 [shape = 'u8[8192]{0}', space=vmem, size = 0x2000, scoped, tag = 'input window, operand 0, single buffered']
    #allocation4 [shape = 's32[1]{0}', space=sflag, size = 0x4, scoped, tag = 'scoped memory for tpu_custom_call.1']
    #allocation5 [shape = 's32[1]{0}', space=sflag, size = 0x4, scoped, tag = 'scoped memory for tpu_custom_call.1']
    #allocation6 [shape = 'u8[16384]{0}', space=vmem, size = 0x4000, scoped, tag = 'input window, operand 1, single buffered']
    #allocation7 [shape = 's32[1]{0}', space=sflag, size = 0x4, scoped, tag = 'scoped memory for tpu_custom_call.1']
    #allocation8 [shape = 'u8[1024]{0}', space=vmem, size = 0x400, scoped, tag = 'output window, operand 0, single buffered']
    %8 = vsyncpa [#allocation4], 0
    %9 = vsyncpa [#allocation7], 0
    %10 = vsyncpa [#allocation5], 0
    // Predicated region
    $region2: #{tpu_custom_call.1} parent=1 // pred_check
      _
    $region3: #{tpu_custom_call.1} parent=1 // pred_check_branch
      %12 = sbr.rel (0) target = $region5
    $region4: #{tpu_custom_call.1} parent=1 // pred_region
      %s14 = ssub.s32 256, 256
      %15 = vsyncadd [#allocation4], %s14
      %s16 = sshll.u32 [#allocation3], 4
      %s17 = int_to_ptr.vmem [resolvable:$true] %s16
      %22 = dma.hbm_to_vmem [thread:$0]  %s0, 256, %s17, [#allocation4], 128, 128, 8
    $region5: #{tpu_custom_call.1} parent=1 // pred_fallthru
      _
    // Predicated region
    $region6: #{tpu_custom_call.1} parent=1 // pred_check
      _
    $region7: #{tpu_custom_call.1} parent=1 // pred_check_branch
      %24 = sbr.rel (0) target = $region9
    $region8: #{tpu_custom_call.1} parent=1 // pred_region
      %s26 = ssub.s32 512, 512
      %27 = vsyncadd [#allocation7], %s26
      %s28 = sshll.u32 [#allocation6], 4
      %s29 = int_to_ptr.vmem [resolvable:$true] %s28
      %34 = dma.hbm_to_vmem [thread:$0]  %s1, 512, %s29, [#allocation7], 128, 128, 8
    $region9: #{tpu_custom_call.1} parent=1 // pred_fallthru
      _
    // Predicated region
    $region10: #{tpu_custom_call.1} parent=1 // pred_check
      _
    $region11: #{tpu_custom_call.1} parent=1 // pred_check_branch
      %36 = sbr.rel (0) target = $region13
    $region12: #{tpu_custom_call.1} parent=1 // pred_region
      _
    $region13: #{tpu_custom_call.1} parent=1 // pred_fallthru
      _
    // Predicated region
    $region14: #{tpu_custom_call.1} parent=1 // pred_check
      _
    $region15: #{tpu_custom_call.1} parent=1 // pred_check_branch
      %38 = sbr.rel (0) target = $region17
    $region16: #{tpu_custom_call.1} parent=1 // pred_region
      %39 = dma.done [#allocation4], 256
    $region17: #{tpu_custom_call.1} parent=1 // pred_fallthru
      _
    // Predicated region
    $region18: #{tpu_custom_call.1} parent=1 // pred_check
      _
    $region19: #{tpu_custom_call.1} parent=1 // pred_check_branch
      %41 = sbr.rel (0) target = $region21
    $region20: #{tpu_custom_call.1} parent=1 // pred_region
      %42 = dma.done [#allocation7], 512
    $region21: #{tpu_custom_call.1} parent=1 // pred_fallthru
      _
    %p43 = scmp.eq.s32.totalorder 0, 0
    // Predicated region
    $region22: #{tpu_custom_call.1} parent=1 // pred_check
      %p44 = pneg %p43
    $region23: #{tpu_custom_call.1} parent=1 // pred_check_branch
      %46 = sbr.rel (%p44) target = $region25
    $region24: #{tpu_custom_call.1} parent=1 // pred_region
      %vm47 = vcmask 254976
      %48 = vst.msk [vmem:[#allocation2] sm:$0x3] %vm47, 0.0
    $region25: #{tpu_custom_call.1} parent=1 // pred_fallthru
      _
    %v49 = vld [vmem:[#allocation2] sm:$0x3]
    %v50 = vld [vmem:[#allocation3] sm:$0xff]
    %v51 = vld [vmem:[#allocation3 + $0x8] sm:$0xff]
    %vm52 = vcmask 261120
    %v53 = vsel %vm52, %v50, 0.0
    %v54 = vrot.slane %v53, 4
    %v55 = vadd.f32 %v53, %v54
    %v56 = vrot.slane %v55, 2
    %v57 = vadd.f32 %v55, %v56
    %v58 = vrot.slane %v57, 1
    %v59 = vadd.f32 %v57, %v58
    %v60 = vsel %vm52, %v51, 0.0
    %v61 = vrot.slane %v60, 4
    %v62 = vadd.f32 %v60, %v61
    %v63 = vrot.slane %v62, 2
    %v64 = vadd.f32 %v62, %v63
    %v65 = vrot.slane %v64, 1
    %v66 = vadd.f32 %v64, %v65
    %vm69 = vcmask 1041409
    %v70 = vsel %vm69, %v66, %v59
    %v72 = vadd.f32 %v49, %v70
    %vm73 = vcmask 254976
    %74 = vst.msk [vmem:[#allocation2] sm:$0x3] %vm73, %v72
    // Predicated region
    $region26: #{tpu_custom_call.1} parent=1 // pred_check
      %p75 = pneg %p43
    $region27: #{tpu_custom_call.1} parent=1 // pred_check_branch
      %77 = sbr.rel (%p75) target = $region29
    $region28: #{tpu_custom_call.1} parent=1 // pred_region
      %v78 = vld [vmem:[#allocation2] sm:$0x3]
      %v79 = vmul.f32 %v78, 0.125
      %v80 = vld [vmem:[#allocation6] sm:$0xff]
      %v81 = vld [vmem:[#allocation6 + $0x8] sm:$0xff]
      %v82 = vld [vmem:[#allocation6 + $0x10] sm:$0xff]
      %v83 = vld [vmem:[#allocation6 + $0x18] sm:$0xff]
      %v84 = vld [vmem:[%s2] sm:$0x1]
      %v86 = vlaneseq
      %v87 = vshrl.u32 %v86, 7
      %v88 = vsub.s32 0, %v87
      %v89 = vrot.slane %v84, %v88
      %v92 = vsel %vm52, %v79, 0
      %94 = vmatprep.subr.mxu0 0.0
      %95 = vmatpush1.msra.mxu0 %v80
      %96 = vmatprep.subr.mxu0 0.0
      %97 = vmatpush1.msra.mxu0 %v81
      %98 = vmatprep.subr.mxu0 0.0
      %99 = vmatpush1.msra.mxu0 %v82
      %100 = vmatprep.subr.mxu0 0.0
      %101 = vmatpush1.msra.mxu0 %v83
      %102 = vmatprep.subr.mxu0 0.0
      %103 = vmatpush1.msra.mxu0 0.0
      %104 = vmatprep.subr.mxu0 0.0
      %105 = vmatpush1.msra.mxu0 0.0
      %106 = vmatprep.subr.mxu0 0.0
      %107 = vmatpush1.msra.mxu0 0.0
      %108 = vmatprep.subr.mxu0 0.0
      %109 = vmatpush1.msra.mxu0 0.0
      %110 = vmatprep.subr.mxu0 0.0
      %111 = vmatpush1.msra.mxu0 0.0
      %112 = vmatprep.subr.mxu0 0.0
      %113 = vmatpush1.msra.mxu0 0.0
      %114 = vmatprep.subr.mxu0 0.0
      %115 = vmatpush1.msra.mxu0 0.0
      %116 = vmatprep.subr.mxu0 0.0
      %117 = vmatpush1.msra.mxu0 0.0
      %118 = vmatprep.subr.mxu0 0.0
      %119 = vmatpush1.msra.mxu0 0.0
      %120 = vmatprep.subr.mxu0 0.0
      %121 = vmatpush1.msra.mxu0 0.0
      %122 = vmatprep.subr.mxu0 0.0
      %123 = vmatpush1.msra.mxu0 0.0
      %124 = vmatprep.subr.mxu0 0.0
      %125 = vmatpush1.msra.mxu0 0.0
      %126 = vmatprep.subr.mxu0 0.0
      %127 = vmatpush1.msra.mxu0 0.0
      %128 = vmatprep.subr.mxu0 0.0
      %129 = vmatpush1.msra.mxu0 0.0
      %130 = vmatprep.subr.mxu0 0.0
      %131 = vmatpush1.msra.mxu0 0.0
      %132 = vmatprep.subr.mxu0 0.0
      %133 = vmatpush1.msra.mxu0 0.0
      %134 = vmatprep.subr.mxu0 0.0
      %135 = vmatpush1.msra.mxu0 0.0
      %136 = vmatprep.subr.mxu0 0.0
      %137 = vmatpush1.msra.mxu0 0.0
      %138 = vmatprep.subr.mxu0 0.0
      %139 = vmatpush1.msra.mxu0 0.0
      %140 = vmatprep.subr.mxu0 0.0
      %141 = vmatpush1.msra.mxu0 0.0
      %142 = vmatprep.subr.mxu0 0.0
      %143 = vmatpush1.msra.mxu0 0.0
      %144 = vmatprep.subr.mxu0 0.0
      %145 = vmatpush1.msra.mxu0 0.0
      %146 = vmatprep.subr.mxu0 0.0
      %147 = vmatpush1.msra.mxu0 0.0
      %148 = vmatprep.subr.mxu0 0.0
      %149 = vmatpush1.msra.mxu0 0.0
      %150 = vmatprep.subr.mxu0 0.0
      %151 = vmatpush1.msra.mxu0 0.0
      %152 = vmatprep.subr.mxu0 0.0
      %153 = vmatpush1.msra.mxu0 0.0
      %154 = vmatprep.subr.mxu0 0.0
      %155 = vmatpush1.msra.mxu0 0.0
      %156 = vmatprep.subr.mxu0 0.0
      %157 = vmatpush1.msra.mxu0 0.0
      %158 = vmatprep.mubr.f32.mxu0 0.0
      %159 = vmatmul.mubr.f32.gmra.mrb[0].mxu0 %v92
      %v160 = vpop.f32.mrb[0].mxu0
      %v161 = vadd.f32 %v89, %v160
      %v162 = vpop.f32.mrb[0].mxu0
      %163 = vdwg.mxu0
      %164 = vst [vmem:[#allocation8] sm:$0x3] %v161
    $region29: #{tpu_custom_call.1} parent=1 // pred_fallthru
      _
    // Predicated region
    $region30: #{tpu_custom_call.1} parent=1 // pred_check
      _
    $region31: #{tpu_custom_call.1} parent=1 // pred_check_branch
      %166 = sbr.rel (0) target = $region33
    $region32: #{tpu_custom_call.1} parent=1 // pred_region
      %s168 = ssub.s32 32, 32
      %169 = vsyncadd [#allocation5], %s168
      %s171 = sshll.u32 [#allocation8], 4
      %s172 = int_to_ptr.vmem [resolvable:$true] %s171
      %174 = dma.vmem_to_hbm [thread:$0]  %s172, 32, %s3, [#allocation5]
    $region33: #{tpu_custom_call.1} parent=1 // pred_fallthru
      _
    // Predicated region
    $region34: #{tpu_custom_call.1} parent=1 // pred_check
      _
    $region35: #{tpu_custom_call.1} parent=1 // pred_check_branch
      %176 = sbr.rel (0) target = $region37
    $region36: #{tpu_custom_call.1} parent=1 // pred_region
      %177 = dma.done [#allocation5], 32
    $region37: #{tpu_custom_call.1} parent=1 // pred_fallthru
      _
    %178 = vsyncpa [#allocation4], 1
    %179 = vsyncpa [#allocation7], 1
    %180 = vsyncpa [#allocation5], 1

</llo_original>
